<compile_context>
chip_gen: v5e
topology: v5e:2x2
jax: 0.10.0
libtpu: 0.0.40
codegen_flags: <defaults>
</compile_context>

<pallas_src>
import functools
import math

import jax
import jax.numpy as jnp
from jax.experimental import pallas as pl
from jax.experimental.pallas import tpu as pltpu


# ----------------------------------------------------------------------------
# pltpu.roll rotation-direction probe (resolved once, cached).  The pooling
# boundary masks depend on whether pltpu.roll follows the jnp.roll convention
# (result[p] == x[(p - shift) % n]); probing makes the kernel robust either way.
# ----------------------------------------------------------------------------
@functools.lru_cache(maxsize=None)
def _roll_matches_numpy():
    def kern(x_ref, o_ref):
        o_ref[...] = pltpu.roll(x_ref[...], 1, axis=1)

    x = jnp.broadcast_to(jnp.arange(128, dtype=jnp.float32), (8, 128))
    y = pl.pallas_call(kern, out_shape=jax.ShapeDtypeStruct((8, 128), jnp.float32))(x)
    v = float(y[0, 0])
    if v == 127.0:
        return True
    if v == 1.0:
        return False
    raise RuntimeError(f"unexpected pltpu.roll semantics (probe value {v})")


# ----------------------------------------------------------------------------
# Fused SPPF kernel.  Per-image layout: (channels, H*W) with H*W on lanes.
# ----------------------------------------------------------------------------
def _make_sppf_kernel(H, W, CH, R, roll_like_numpy):
    HW = H * W
    NEG = float("-inf")

    def kernel(x_ref, w1t_ref, b1_ref, w2t_ref, b2_ref, o_ref, cat_ref):
        # ---- cv1: 1x1 conv (BN scale folded) + bias + ReLU; bf16 MXU, f32 acc.
        xb = x_ref[0].astype(jnp.bfloat16)                      # (C1, HW)
        h = jnp.dot(w1t_ref[...], xb, preferred_element_type=jnp.float32)
        h = jnp.maximum(h + b1_ref[...], 0.0)                   # (CH, HW) f32

        # Flattened spatial index p = row*W + col lives on the lane axis.
        lane = jax.lax.broadcasted_iota(jnp.int32, (CH, HW), 1)
        col = lane % W
        row = lane // W
        ok_cf = [col < (W - d) for d in range(1, R + 1)]   # p+d stays in its row
        ok_cb = [col >= d for d in range(1, R + 1)]        # p-d stays in its row
        ok_rf = [row < (H - d) for d in range(1, R + 1)]   # p+d*W stays in image
        ok_rb = [row >= d for d in range(1, R + 1)]        # p-d*W stays in image

        def roll_fwd(z, s):   # position p receives z[p + s]   (circular)
            return pltpu.roll(z, (HW - s) if roll_like_numpy else s, axis=1)

        def roll_bwd(z, s):   # position p receives z[p - s]   (circular)
            return pltpu.roll(z, s if roll_like_numpy else (HW - s), axis=1)

        def pool5(z):
            """Separable k x k / stride-1 / pad-(k//2) max pool: XLU lane rolls
            plus boundary masks reproduce MaxPool2d's implicit -inf padding."""
            t = z
            for d in range(1, R + 1):                      # 1 x k pass along W
                t = jnp.maximum(t, jnp.where(ok_cf[d - 1], roll_fwd(z, d), NEG))
                t = jnp.maximum(t, jnp.where(ok_cb[d - 1], roll_bwd(z, d), NEG))
            o = t
            for d in range(1, R + 1):                      # k x 1 pass along H
                o = jnp.maximum(o, jnp.where(ok_rf[d - 1], roll_fwd(t, d * W), NEG))
                o = jnp.maximum(o, jnp.where(ok_rb[d - 1], roll_bwd(t, d * W), NEG))
            return o

        y1 = pool5(h)
        y2 = pool5(y1)
        y3 = pool5(y2)

        # ---- cv2 over the virtual concat [h, y1, y2, y3]: build it in a bf16
        #      VMEM scratch (never HBM) and contract in ONE K=4*CH MXU matmul.
        cat_ref[0 * CH:1 * CH, :] = h.astype(jnp.bfloat16)
        cat_ref[1 * CH:2 * CH, :] = y1.astype(jnp.bfloat16)
        cat_ref[2 * CH:3 * CH, :] = y2.astype(jnp.bfloat16)
        cat_ref[3 * CH:4 * CH, :] = y3.astype(jnp.bfloat16)
        out = jnp.dot(w2t_ref[...], cat_ref[...], preferred_element_type=jnp.float32)
        o_ref[0] = jnp.maximum(out + b2_ref[...], 0.0).astype(o_ref.dtype)

    return kernel


# ----------------------------------------------------------------------------
# Full SPPF forward (NCHW in / NCHW out, like the PyTorch module)
# ----------------------------------------------------------------------------
def sppf_forward(x_nchw, w1, s1, b1, w2, s2, b2, k=5):
    N, C1, H, W = x_nchw.shape
    CH = w1.shape[1]          # c_ = c1 // 2
    C2 = w2.shape[1]
    R = k // 2
    HW = H * W

    # NCHW stays NCHW: only free contiguous reshapes at the boundary; the
    # kernel works on (channels, H*W) tiles with H*W on the lane axis.
    x3 = x_nchw.reshape(N, C1, HW)

    # Fold the BN scale into the conv weights, pre-transpose them so both 1x1
    # convs are (out_ch, K) @ (K, HW) MXU matmuls, and cast weights to bf16.
    w1t = jnp.transpose(w1 * s1).astype(jnp.bfloat16)        # (CH, C1)
    w2t = jnp.transpose(w2 * s2).astype(jnp.bfloat16)        # (C2, 4*CH)
    b1c = jnp.transpose(b1).astype(jnp.float32)              # (CH, 1)
    b2c = jnp.transpose(b2).astype(jnp.float32)              # (C2, 1)

    kernel = _make_sppf_kernel(H, W, CH, R, _roll_matches_numpy())
    out = pl.pallas_call(
        kernel,
        out_shape=jax.ShapeDtypeStruct((N, C2, HW), x_nchw.dtype),
        grid=(N,),
        in_specs=[
            pl.BlockSpec((1, C1, HW), lambda n: (n, 0, 0)),
            pl.BlockSpec((CH, C1), lambda n: (0, 0)),
            pl.BlockSpec((CH, 1), lambda n: (0, 0)),
            pl.BlockSpec((C2, 4 * CH), lambda n: (0, 0)),
            pl.BlockSpec((C2, 1), lambda n: (0, 0)),
        ],
        out_specs=pl.BlockSpec((1, C2, HW), lambda n: (n, 0, 0)),
        scratch_shapes=[pltpu.VMEM((4 * CH, HW), jnp.bfloat16)],  # virtual concat
        compiler_params=pltpu.CompilerParams(
            dimension_semantics=("parallel",),
            vmem_limit_bytes=64 * 1024 * 1024,
        ),
    )(x3, w1t, b1c, w2t, b2c)

    return out.reshape(N, C2, H, W)


# ----------------------------------------------------------------------------
# Pure-JAX reference (for correctness check).  mxu_bf16=True mirrors the
# kernel's deliberate bf16 MXU feeds (with f32 accumulation); mxu_bf16=False
# is the full-f32 math of the PyTorch module (eval-mode BN).
# ----------------------------------------------------------------------------
def sppf_reference(x_nchw, w1, s1, b1, w2, s2, b2, k=5, mxu_bf16=False):
    x = jnp.transpose(x_nchw, (0, 2, 3, 1))
    w1f = w1 * s1
    w2f = w2 * s2
    if mxu_bf16:
        x = x.astype(jnp.bfloat16)
        w1f = w1f.astype(jnp.bfloat16)
        w2f = w2f.astype(jnp.bfloat16)

    def cbr(z, w, b):
        y = jnp.einsum("nhwc,cd->nhwd", z, w,
                       preferred_element_type=jnp.float32,
                       precision=jax.lax.Precision.HIGHEST) + b[0]
        return jnp.maximum(y, 0.0)

    def mp(z):
        pad = k // 2
        return jax.lax.reduce_window(
            z, -jnp.inf, jax.lax.max,
            window_dimensions=(1, k, k, 1),
            window_strides=(1, 1, 1, 1),
            padding=((0, 0), (pad, pad), (pad, pad), (0, 0)),
        )

    h = cbr(x, w1f, b1)
    y1 = mp(h)
    y2 = mp(y1)
    y3 = mp(y2)
    cat = jnp.concatenate([h, y1, y2, y3], axis=-1)
    if mxu_bf16:
        cat = cat.astype(jnp.bfloat16)
    out = cbr(cat, w2f, b2)
    return jnp.transpose(out, (0, 3, 1, 2))


# ----------------------------------------------------------------------------
if __name__ == "__main__":
    key = jax.random.PRNGKey(0)
    N, c1, H, W = 2, 4, 16, 16
    c2, k = 8, 5
    c_ = c1 // 2

    k_x, k_w1, k_w2 = jax.random.split(key, 3)
    x_nchw = jax.random.normal(k_x, (N, c1, H, W), dtype=jnp.float32)

    # Conv weights: normal(0, sqrt(2/n)) with n = kh*kw*out_channels (1x1 convs).
    std1 = math.sqrt(2.0 / (1 * 1 * c_))
    std2 = math.sqrt(2.0 / (1 * 1 * c2))
    w1 = (jax.random.normal(k_w1, (c1, c_)) * std1).astype(jnp.float32)
    w2 = (jax.random.normal(k_w2, (4 * c_, c2)) * std2).astype(jnp.float32)

    # Folded eval-mode BatchNorm: gamma=1, beta=0, running_mean=0, running_var=1.
    eps = 1e-5
    bn_scale = 1.0 / math.sqrt(1.0 + eps)
    s1 = jnp.full((1, c_), bn_scale, jnp.float32)
    b1 = jnp.zeros((1, c_), jnp.float32)
    s2 = jnp.full((1, c2), bn_scale, jnp.float32)
    b2 = jnp.zeros((1, c2), jnp.float32)

    out = jax.block_until_ready(sppf_forward(x_nchw, w1, s1, b1, w2, s2, b2, k=k))
    assert out.shape == (N, c2, H, W), out.shape

    # Tight check vs. a reference applying the same deliberate bf16 MXU feeds.
    ref_bf16 = jax.block_until_ready(
        sppf_reference(x_nchw, w1, s1, b1, w2, s2, b2, k=k, mxu_bf16=True))
    err_bf16 = float(jnp.max(jnp.abs(out - ref_bf16)))
    assert jnp.allclose(out, ref_bf16, atol=1e-2, rtol=1e-2), err_bf16

    # Loose sanity check vs. the full-f32 module math; the slack is the bf16
    # quantization of the MXU inputs (deliberate precision/perf tradeoff).
    ref_f32 = jax.block_until_ready(
        sppf_reference(x_nchw, w1, s1, b1, w2, s2, b2, k=k, mxu_bf16=False))
    err_f32 = float(jnp.max(jnp.abs(out - ref_f32)))
    assert jnp.allclose(out, ref_f32, atol=2.5e-1, rtol=1e-1), err_f32

    print("KERNEL_OK")
</pallas_src>

<mosaic_0001>
module attributes {stable_mosaic.version = 11 : i64} {
  func.func @kern(%arg0: memref<8x128xf32, #tpu.memory_space<vmem>>, %arg1: memref<8x128xf32, #tpu.memory_space<vmem>>) attributes {dimension_semantics = [], scalar_prefetch = 0 : i64, scratch_operands = 0 : i64, tpu.core_type = #tpu.core_type<tc>} {
    %c0 = arith.constant 0 : index
    %c0_0 = arith.constant 0 : index
    %0 = vector.load %arg0[%c0, %c0_0] : memref<8x128xf32, #tpu.memory_space<vmem>>, vector<8x128xf32>
    %c1_i32 = arith.constant 1 : i32
    %1 = tpu.dynamic_rotate %0 by %c1_i32 dim 1 : vector<8x128xf32>, i32 -> vector<8x128xf32>
    %c0_1 = arith.constant 0 : index
    %c0_2 = arith.constant 0 : index
    %2 = vector.load %arg1[%c0_1, %c0_2] : memref<8x128xf32, #tpu.memory_space<vmem>>, vector<8x128xf32>
    tpu.vector_store %arg1[%c0_1, %c0_2], %1 {strides = array<i32>} : memref<8x128xf32, #tpu.memory_space<vmem>>, vector<8x128xf32>,
    return
  }
}

</mosaic_0001>

<llo_original>
// kernel: tpu_custom_call.1
$region0: #{tpu_custom_call.1}
  #allocation0 [shape = 'u32[]', space=smem, size = 0x4, offset = 0x4, fixed_abs, tag = 'smem constant byte address 0x4 - core index']
  #allocation1 [shape = 'u32[72,128]{1,0:T(1,128)}', space=vmem, size = 0x9000, scoped, tag = 'internal scratch']
  %s0 = inlined_call_operand.hbm [shape: f32[8,128], index: 0, kind: input, shape index: {}]
  %s1 = inlined_call_operand.hbm [shape: f32[8,128], index: 1, kind: output, shape index: {}]
  %s2 = sld [smem:[#allocation0]]
  $region18: #{tpu_custom_call.1} parent=0
    _
  %s4 = ssub.s32 1, %s2
  %s5 = scalar_select 0, %s4, %s2
  $region1: #{tpu_custom_call.1} parent=0
    #allocation2 [shape = 'u8[4096]{0}', space=vmem, size = 0x1000, scoped, tag = 'input window, operand 0, single buffered']
    #allocation3 [shape = 's32[1]{0}', space=sflag, size = 0x4, scoped, tag = 'scoped memory for tpu_custom_call.1']
    #allocation4 [shape = 's32[1]{0}', space=sflag, size = 0x4, scoped, tag = 'scoped memory for tpu_custom_call.1']
    #allocation5 [shape = 'u8[4096]{0}', space=vmem, size = 0x1000, scoped, tag = 'output window, operand 0, single buffered']
    %6 = vsyncpa [#allocation3], 0
    %7 = vsyncpa [#allocation4], 0
    // Predicated region
    $region2: #{tpu_custom_call.1} parent=1 // pred_check
      _
    $region3: #{tpu_custom_call.1} parent=1 // pred_check_branch
      %9 = sbr.rel (0) target = $region5
    $region4: #{tpu_custom_call.1} parent=1 // pred_region
      %11 = vsyncadd [#allocation3], 0
      %s13 = sshll.u32 %s0, 4
      %s14 = int_to_ptr.hbm [resolvable:$true] %s13
      %s15 = sshll.u32 [#allocation2], 4
      %s16 = int_to_ptr.vmem [resolvable:$true] %s15
      %18 = dma.hbm_to_vmem [thread:$0]  %s14, 128, %s16, [#allocation3]
    $region5: #{tpu_custom_call.1} parent=1 // pred_fallthru
      _
    // Predicated region
    $region6: #{tpu_custom_call.1} parent=1 // pred_check
      _
    $region7: #{tpu_custom_call.1} parent=1 // pred_check_branch
      %20 = sbr.rel (0) target = $region9
    $region8: #{tpu_custom_call.1} parent=1 // pred_region
      %22 = dma.done [#allocation3], 128
    $region9: #{tpu_custom_call.1} parent=1 // pred_fallthru
      _
    %v23 = vld [vmem:[#allocation2] sm:$0xff]
    %24 = vrot.lane.b32.xlu0 %v23, 1
    %v25 = vpop.permute.xlu0 %24
    %26 = vst [vmem:[#allocation5] sm:$0xff] %v25
    // Predicated region
    $region10: #{tpu_custom_call.1} parent=1 // pred_check
      _
    $region11: #{tpu_custom_call.1} parent=1 // pred_check_branch
      %28 = sbr.rel (0) target = $region13
    $region12: #{tpu_custom_call.1} parent=1 // pred_region
      %30 = vsyncadd [#allocation4], 0
      %s32 = sshll.u32 [#allocation5], 4
      %s33 = int_to_ptr.vmem [resolvable:$true] %s32
      %s34 = sshll.u32 %s1, 4
      %s35 = int_to_ptr.hbm [resolvable:$true] %s34
      %37 = dma.vmem_to_hbm [thread:$0]  %s33, 128, %s35, [#allocation4]
    $region13: #{tpu_custom_call.1} parent=1 // pred_fallthru
      _
    // Predicated region
    $region14: #{tpu_custom_call.1} parent=1 // pred_check
      _
    $region15: #{tpu_custom_call.1} parent=1 // pred_check_branch
      %39 = sbr.rel (0) target = $region17
    $region16: #{tpu_custom_call.1} parent=1 // pred_region
      %41 = dma.done [#allocation4], 128
    $region17: #{tpu_custom_call.1} parent=1 // pred_fallthru
      _
    %42 = vsyncpa [#allocation3], 1
    %43 = vsyncpa [#allocation4], 1

</llo_original>
